<compile_context>
chip_gen: v7x
topology: tpu7x:2x2x1
jax: 0.10.0
libtpu: 0.0.40
codegen_flags: <defaults>
</compile_context>

<pallas_src>
import math
import functools

import jax
import jax.numpy as jnp
from jax.experimental import pallas as pl
from jax.experimental.pallas import tpu as pltpu


def _tile(dim, target):
    """Tile size <= target that divides dim (falls back to the full extent)."""
    t = min(target, dim)
    return t if dim % t == 0 else dim


# ------------------------------------------------------------------
# Fused RMSNorm + matmul  (input_layernorm + QKV projection)
# ------------------------------------------------------------------

def _rms_matmul_kernel(eps, x_ref, lnw_ref, w_ref, o_ref):
    x = x_ref[...].astype(jnp.float32)
    var = jnp.mean(x * x, axis=-1, keepdims=True)
    xn = (x * jax.lax.rsqrt(var + eps)) * lnw_ref[...].astype(jnp.float32)
    o_ref[...] = jnp.dot(xn.astype(x_ref.dtype), w_ref[...],
                         preferred_element_type=jnp.float32).astype(o_ref.dtype)


def rms_matmul(x, ln_w, w, eps, *, m_tile=256, n_tile=256):
    M, K = x.shape
    _, N = w.shape
    tm = _tile(M, m_tile)
    tn = _tile(N, n_tile)
    return pl.pallas_call(
        functools.partial(_rms_matmul_kernel, eps),
        out_shape=jax.ShapeDtypeStruct((M, N), x.dtype),
        grid=(M // tm, N // tn),
        in_specs=[pl.BlockSpec((tm, K), lambda i, j: (i, 0)),
                  pl.BlockSpec((1, K), lambda i, j: (0, 0)),
                  pl.BlockSpec((K, tn), lambda i, j: (0, j))],
        out_specs=pl.BlockSpec((tm, tn), lambda i, j: (i, j)),
        compiler_params=pltpu.CompilerParams(
            dimension_semantics=("parallel", "parallel")),
        cost_estimate=pl.CostEstimate(
            flops=2 * M * K * N, transcendentals=0,
            bytes_accessed=int(M * K + K * N + M * N) * x.dtype.itemsize),
    )(x, ln_w.reshape(1, K), w)


# ------------------------------------------------------------------
# Tiled matmul + residual add  (o_proj + first residual)
# ------------------------------------------------------------------

def _matmul_residual_kernel(x_ref, w_ref, r_ref, o_ref, acc_ref):
    @pl.when(pl.program_id(2) == 0)
    def _():
        acc_ref[...] = jnp.zeros_like(acc_ref)

    acc_ref[...] += jnp.dot(x_ref[...], w_ref[...],
                            preferred_element_type=jnp.float32)

    @pl.when(pl.program_id(2) == pl.num_programs(2) - 1)
    def _():
        o_ref[...] = (r_ref[...].astype(jnp.float32)
                      + acc_ref[...]).astype(o_ref.dtype)


def matmul_residual(x, w, res, *, m_tile=256, n_tile=256, k_tile=512):
    M, K = x.shape
    _, N = w.shape
    tm = _tile(M, m_tile)
    tn = _tile(N, n_tile)
    tk = _tile(K, k_tile)
    return pl.pallas_call(
        _matmul_residual_kernel,
        out_shape=jax.ShapeDtypeStruct((M, N), x.dtype),
        grid=(M // tm, N // tn, K // tk),
        in_specs=[pl.BlockSpec((tm, tk), lambda i, j, k: (i, k)),
                  pl.BlockSpec((tk, tn), lambda i, j, k: (k, j)),
                  pl.BlockSpec((tm, tn), lambda i, j, k: (i, j))],
        out_specs=pl.BlockSpec((tm, tn), lambda i, j, k: (i, j)),
        scratch_shapes=[pltpu.VMEM((tm, tn), jnp.float32)],
        compiler_params=pltpu.CompilerParams(
            dimension_semantics=("parallel", "parallel", "arbitrary")),
        cost_estimate=pl.CostEstimate(
            flops=2 * M * K * N, transcendentals=0,
            bytes_accessed=int(M * K + K * N + 2 * M * N) * x.dtype.itemsize),
    )(x, w, res)


# ------------------------------------------------------------------
# Flash attention: in-kernel RoPE + causal mask + online softmax.
# Reads Q/K/V head-strided from the fused (B*S, 3H) QKV slab, writes
# (B*S, H) row-major (no transposes around attention).
# ------------------------------------------------------------------

_MASK = -1e30  # exp() underflows to exactly 0, matching finfo.min mask + clamp


def _flash_attn_kernel(scale, q_ref, k_ref, v_ref,
                       cosq_ref, sinq_ref, cosk_ref, sink_ref,
                       o_ref, m_sc, l_sc, acc_sc):
    qi = pl.program_id(2)
    ki = pl.program_id(3)
    tq, d = q_ref.shape
    tkv = k_ref.shape[0]

    @pl.when(ki == 0)
    def _():
        m_sc[...] = jnp.full_like(m_sc, -jnp.inf)
        l_sc[...] = jnp.zeros_like(l_sc)
        acc_sc[...] = jnp.zeros_like(acc_sc)

    # Skip KV tiles strictly in the causal future of this Q tile.
    @pl.when(ki * tkv <= qi * tq + (tq - 1))
    def _():
        q = q_ref[...].astype(jnp.float32)
        k = k_ref[...].astype(jnp.float32)
        v = v_ref[...].astype(jnp.float32)
        cos_q = cosq_ref[0].astype(jnp.float32)
        sin_q = sinq_ref[0].astype(jnp.float32)
        cos_k = cosk_ref[0].astype(jnp.float32)
        sin_k = sink_ref[0].astype(jnp.float32)

        def rot_half(x):
            # TODO(synk): pltpu.roll(x, d // 2, axis=-1) * sign would push this
            # onto the (idle) XLU; kept as slice+concat for lowering robustness.
            return jnp.concatenate([-x[:, d // 2:], x[:, :d // 2]], axis=-1)

        qe = q * cos_q + rot_half(q) * sin_q
        ke = k * cos_k + rot_half(k) * sin_k

        # Q @ K^T without materializing a transpose.
        s = jax.lax.dot_general(qe, ke, (((1,), (1,)), ((), ())),
                                preferred_element_type=jnp.float32) * scale

        q_pos = qi * tq + jax.lax.broadcasted_iota(jnp.int32, (tq, tkv), 0)
        k_pos = ki * tkv + jax.lax.broadcasted_iota(jnp.int32, (tq, tkv), 1)
        s = jnp.where(k_pos <= q_pos, s, _MASK)

        m_prev = m_sc[...]
        m_new = jnp.maximum(m_prev, s.max(axis=-1, keepdims=True))
        alpha = jnp.exp(m_prev - m_new)
        p = jnp.exp(s - m_new)
        l_sc[...] = alpha * l_sc[...] + p.sum(axis=-1, keepdims=True)
        acc_sc[...] = alpha * acc_sc[...] + jnp.dot(
            p, v, preferred_element_type=jnp.float32)
        m_sc[...] = m_new

    @pl.when(ki == pl.num_programs(3) - 1)
    def _():
        o_ref[...] = (acc_sc[...] / l_sc[...]).astype(o_ref.dtype)


def flash_attention(qkv2d, cos_g, sin_g, batch, seq, num_heads, head_dim,
                    *, q_tile=128, kv_tile=128):
    M = batch * seq
    H = num_heads * head_dim
    t = _tile(seq, min(q_tile, kv_tile))
    tq = tkv = t
    nq = seq // tq
    nkv = seq // tkv
    scale = 1.0 / math.sqrt(head_dim)

    in_specs = [
        # Q / K / V are head-strided column slabs of the fused QKV slab.
        pl.BlockSpec((tq, head_dim),
                     lambda b, h, qi, ki: (b * nq + qi, h)),
        pl.BlockSpec((tkv, head_dim),
                     lambda b, h, qi, ki: (b * nkv + ki, num_heads + h)),
        pl.BlockSpec((tkv, head_dim),
                     lambda b, h, qi, ki: (b * nkv + ki, 2 * num_heads + h)),
        # cos/sin for the query tile and for the key tile.
        pl.BlockSpec((1, tq, head_dim), lambda b, h, qi, ki: (b, qi, 0)),
        pl.BlockSpec((1, tq, head_dim), lambda b, h, qi, ki: (b, qi, 0)),
        pl.BlockSpec((1, tkv, head_dim), lambda b, h, qi, ki: (b, ki, 0)),
        pl.BlockSpec((1, tkv, head_dim), lambda b, h, qi, ki: (b, ki, 0)),
    ]
    out_spec = pl.BlockSpec((tq, head_dim),
                            lambda b, h, qi, ki: (b * nq + qi, h))

    return pl.pallas_call(
        functools.partial(_flash_attn_kernel, scale),
        out_shape=jax.ShapeDtypeStruct((M, H), qkv2d.dtype),
        grid=(batch, num_heads, nq, nkv),
        in_specs=in_specs,
        out_specs=out_spec,
        scratch_shapes=[pltpu.VMEM((tq, 1), jnp.float32),
                        pltpu.VMEM((tq, 1), jnp.float32),
                        pltpu.VMEM((tq, head_dim), jnp.float32)],
        compiler_params=pltpu.CompilerParams(
            dimension_semantics=("parallel", "parallel", "parallel",
                                 "arbitrary")),
    )(qkv2d, qkv2d, qkv2d, cos_g, sin_g, cos_g, sin_g)


# ------------------------------------------------------------------
# Fused post-attention RMSNorm + SwiGLU MLP + residual, I-tiled reduction
# ------------------------------------------------------------------

def _rms_mlp_kernel(eps, x_ref, lnw_ref, wg_ref, wu_ref, wd_ref, r_ref, o_ref,
                    xn_sc, acc_sc):
    it = pl.program_id(1)

    @pl.when(it == 0)
    def _():
        x = x_ref[...].astype(jnp.float32)
        var = jnp.mean(x * x, axis=-1, keepdims=True)
        xn_sc[...] = (x * jax.lax.rsqrt(var + eps)) * lnw_ref[...].astype(jnp.float32)
        acc_sc[...] = jnp.zeros_like(acc_sc)

    xn = xn_sc[...].astype(x_ref.dtype)
    g = jnp.dot(xn, wg_ref[...], preferred_element_type=jnp.float32)
    u = jnp.dot(xn, wu_ref[...], preferred_element_type=jnp.float32)
    h = (g * jax.nn.sigmoid(g)) * u                     # SiLU(gate) * up
    acc_sc[...] += jnp.dot(h.astype(x_ref.dtype), wd_ref[...],
                           preferred_element_type=jnp.float32)

    @pl.when(it == pl.num_programs(1) - 1)
    def _():
        o_ref[...] = (r_ref[...].astype(jnp.float32)
                      + acc_sc[...]).astype(o_ref.dtype)


def rms_mlp(x, ln_w, wg, wu, wd, res, eps, *, m_tile=256, i_tile=256):
    M, H = x.shape
    _, I = wg.shape
    tm = _tile(M, m_tile)
    ti = _tile(I, i_tile)
    return pl.pallas_call(
        functools.partial(_rms_mlp_kernel, eps),
        out_shape=jax.ShapeDtypeStruct((M, H), x.dtype),
        grid=(M // tm, I // ti),
        in_specs=[pl.BlockSpec((tm, H), lambda i, j: (i, 0)),
                  pl.BlockSpec((1, H), lambda i, j: (0, 0)),
                  pl.BlockSpec((H, ti), lambda i, j: (0, j)),
                  pl.BlockSpec((H, ti), lambda i, j: (0, j)),
                  pl.BlockSpec((ti, H), lambda i, j: (j, 0)),
                  pl.BlockSpec((tm, H), lambda i, j: (i, 0))],
        out_specs=pl.BlockSpec((tm, H), lambda i, j: (i, 0)),
        scratch_shapes=[pltpu.VMEM((tm, H), jnp.float32),
                        pltpu.VMEM((tm, H), jnp.float32)],
        compiler_params=pltpu.CompilerParams(
            dimension_semantics=("parallel", "arbitrary")),
        cost_estimate=pl.CostEstimate(
            flops=6 * M * H * I, transcendentals=M * I,
            bytes_accessed=int(3 * H * I + 3 * M * H) * x.dtype.itemsize),
    )(x, ln_w.reshape(1, H), wg, wu, wd, res)


# ------------------------------------------------------------------
# Decoder layer forward (glue in plain JAX, compute in kernels above)
# ------------------------------------------------------------------

def llama_decoder_layer(params, hidden_states, attention_mask, position_ids):
    B, S, H = hidden_states.shape
    nh = params["num_heads"]
    dh = H // nh
    eps = params["eps"]

    x2d = hidden_states.reshape(B * S, H)
    residual = x2d

    # fused input_layernorm + QKV projection against [wq | wk | wv]
    qkv = rms_matmul(x2d, params["input_ln_w"], params["wqkv"], eps)

    # rotary table gather (plain-JAX glue)
    cos_g = params["cos_table"][position_ids]   # (B, S, head_dim)
    sin_g = params["sin_table"][position_ids]

    # flash attention with in-kernel RoPE + causal mask + online softmax.
    # TODO(synk): attention_mask is assumed causal and regenerated in-kernel;
    # arbitrary additive masks would need to be fed as a tiled mask input.
    del attention_mask
    attn2d = flash_attention(qkv, cos_g, sin_g, B, S, nh, dh)

    # o_proj + first residual
    h = matmul_residual(attn2d, params["wo"], residual)

    # post_attention_layernorm + SwiGLU MLP + second residual
    out2d = rms_mlp(h, params["post_ln_w"], params["wg"], params["wu"],
                    params["wd"], h, eps)
    return out2d.reshape(B, S, H)


# ------------------------------------------------------------------
# Pure-JAX reference (mirrors the PyTorch module semantics)
# ------------------------------------------------------------------

def reference_layer(params, hidden_states, attention_mask, position_ids):
    B, S, H = hidden_states.shape
    nh = params["num_heads"]
    dh = H // nh
    eps = params["eps"]
    wqkv = params["wqkv"]
    wq, wk, wv = wqkv[:, :H], wqkv[:, H:2 * H], wqkv[:, 2 * H:]

    def rms(x, w):
        var = jnp.mean(x.astype(jnp.float32) ** 2, axis=-1, keepdims=True)
        return w * (x * jax.lax.rsqrt(var + eps))

    def rotate_half(x):
        d = x.shape[-1]
        return jnp.concatenate([-x[..., d // 2:], x[..., :d // 2]], axis=-1)

    residual = hidden_states
    hn = rms(hidden_states, params["input_ln_w"])

    q = (hn @ wq).reshape(B, S, nh, dh).transpose(0, 2, 1, 3)
    k = (hn @ wk).reshape(B, S, nh, dh).transpose(0, 2, 1, 3)
    v = (hn @ wv).reshape(B, S, nh, dh).transpose(0, 2, 1, 3)

    cos = params["cos_table"][position_ids][:, None, :, :]   # (B,1,S,dh)
    sin = params["sin_table"][position_ids][:, None, :, :]
    qe = q * cos + rotate_half(q) * sin
    ke = k * cos + rotate_half(k) * sin

    scores = jnp.einsum("bhqd,bhkd->bhqk", qe, ke) / math.sqrt(dh)
    scores = scores + attention_mask
    scores = jnp.maximum(scores, jnp.finfo(jnp.float32).min)
    p = jax.nn.softmax(scores.astype(jnp.float32), axis=-1)
    attn = jnp.einsum("bhqk,bhkd->bhqd", p, v)
    attn = attn.transpose(0, 2, 1, 3).reshape(B, S, H)
    h = residual + attn @ params["wo"]

    hn2 = rms(h, params["post_ln_w"])
    g = hn2 @ params["wg"]
    u = hn2 @ params["wu"]
    return h + ((g * jax.nn.sigmoid(g)) * u) @ params["wd"]


# ------------------------------------------------------------------
# Main
# ------------------------------------------------------------------

if __name__ == "__main__":
    # small LlamaConfig-like setup; head_dim=128 keeps head tiles lane-dense.
    B, S = 2, 16
    hidden_size = 256
    num_heads = 2
    head_dim = hidden_size // num_heads          # 128
    intermediate_size = 512
    max_pos = 32
    eps = 1e-6
    dtype = jnp.float32

    key = jax.random.PRNGKey(0)
    ks = jax.random.split(key, 10)

    def w(k, shape):
        return (0.02 * jax.random.normal(k, shape)).astype(dtype)

    # rotary cos/sin caches (same construction as LlamaRotaryEmbedding)
    inv_freq = 1.0 / (10000.0 ** (jnp.arange(0, head_dim, 2, dtype=jnp.float32) / head_dim))
    t = jnp.arange(max_pos, dtype=jnp.float32)
    freqs = jnp.einsum("i,j->ij", t, inv_freq)
    emb = jnp.concatenate([freqs, freqs], axis=-1)          # (max_pos, head_dim)

    wq = w(ks[0], (hidden_size, hidden_size))
    wk = w(ks[1], (hidden_size, hidden_size))
    wv = w(ks[2], (hidden_size, hidden_size))

    params = {
        "num_heads": num_heads,
        "eps": eps,
        "wqkv": jnp.concatenate([wq, wk, wv], axis=1),      # fused (H, 3H)
        "wo": w(ks[3], (hidden_size, hidden_size)),
        "wg": w(ks[4], (hidden_size, intermediate_size)),
        "wu": w(ks[5], (hidden_size, intermediate_size)),
        "wd": w(ks[6], (intermediate_size, hidden_size)),
        "input_ln_w": (1.0 + 0.1 * jax.random.normal(ks[7], (hidden_size,))).astype(dtype),
        "post_ln_w": (1.0 + 0.1 * jax.random.normal(ks[8], (hidden_size,))).astype(dtype),
        "cos_table": jnp.cos(emb).astype(dtype),
        "sin_table": jnp.sin(emb).astype(dtype),
    }

    hidden_states = jax.random.normal(ks[9], (B, S, hidden_size), dtype=dtype)
    position_ids = jnp.broadcast_to(jnp.arange(S, dtype=jnp.int32), (B, S))

    # causal additive mask (consumed by the reference; the Pallas kernel
    # regenerates the same causal mask in-kernel)
    neg = jnp.finfo(dtype).min
    causal = jnp.where(jnp.arange(S)[None, :] <= jnp.arange(S)[:, None],
                       0.0, neg).astype(dtype)
    attention_mask = jnp.broadcast_to(causal, (B, 1, S, S))

    out = llama_decoder_layer(params, hidden_states, attention_mask, position_ids)
    out = jax.block_until_ready(out)

    ref = reference_layer(params, hidden_states, attention_mask, position_ids)
    ref = jax.block_until_ready(ref)

    assert out.shape == (B, S, hidden_size) and out.dtype == dtype
    max_diff = jnp.max(jnp.abs(out - ref))
    assert jnp.allclose(out, ref, rtol=2e-3, atol=2e-3), f"max abs diff {max_diff}"

    print("KERNEL_OK")
</pallas_src>

<mosaic_0001>
module attributes {stable_mosaic.version = 11 : i64} {
  func.func @_rms_matmul_kernel(%arg0: i32, %arg1: i32, %arg2: memref<32x256xf32, #tpu.memory_space<vmem>>, %arg3: memref<1x256xf32, #tpu.memory_space<vmem>>, %arg4: memref<256x256xf32, #tpu.memory_space<vmem>>, %arg5: memref<32x256xf32, #tpu.memory_space<vmem>>) attributes {dimension_semantics = [#tpu.dimension_semantics<parallel>, #tpu.dimension_semantics<parallel>], iteration_bounds = array<i64: 1, 3>, scalar_prefetch = 0 : i64, scratch_operands = 0 : i64, tpu.core_type = #tpu.core_type<tc>, window_params = [{transform_indices = @transform_0, window_bounds = array<i64: 32, 256>}, {pipeline_mode = #tpu.pipeline_mode<synchronous>, transform_indices = @transform_1, window_bounds = array<i64: 1, 256>}, {transform_indices = @transform_2, window_bounds = array<i64: 256, 256>}, {transform_indices = @transform_3, window_bounds = array<i64: 32, 256>}]} {
    %c0 = arith.constant 0 : index
    %c0_0 = arith.constant 0 : index
    %0 = vector.load %arg2[%c0, %c0_0] : memref<32x256xf32, #tpu.memory_space<vmem>>, vector<32x256xf32>
    %1 = arith.mulf %0, %0 : vector<32x256xf32>
    %cst = arith.constant dense<0.000000e+00> : vector<32xf32>
    %2 = vector.multi_reduction <add>, %1, %cst [1] : vector<32x256xf32> to vector<32xf32>
    %3 = vector.shape_cast %2 : vector<32xf32> to vector<32x1xf32>
    %cst_1 = arith.constant 2.560000e+02 : f32
    %4 = vector.broadcast %cst_1 : f32 to vector<32x1xf32>
    %5 = arith.divf %3, %4 : vector<32x1xf32>
    %cst_2 = arith.constant 9.99999997E-7 : f32
    %6 = vector.broadcast %cst_2 : f32 to vector<32x1xf32>
    %7 = arith.addf %5, %6 : vector<32x1xf32>
    %8 = math.rsqrt %7 : vector<32x1xf32>
    %9 = vector.broadcast %8 : vector<32x1xf32> to vector<32x256xf32>
    %10 = arith.mulf %0, %9 : vector<32x256xf32>
    %c0_3 = arith.constant 0 : index
    %c0_4 = arith.constant 0 : index
    %11 = vector.load %arg3[%c0_3, %c0_4] : memref<1x256xf32, #tpu.memory_space<vmem>>, vector<1x256xf32>
    %12 = vector.broadcast %11 : vector<1x256xf32> to vector<32x256xf32>
    %13 = arith.mulf %10, %12 : vector<32x256xf32>
    %c0_5 = arith.constant 0 : index
    %c0_6 = arith.constant 0 : index
    %14 = vector.load %arg4[%c0_5, %c0_6] : memref<256x256xf32, #tpu.memory_space<vmem>>, vector<256x256xf32>
    %cst_7 = arith.constant dense<0.000000e+00> : vector<32x256xf32>
    %15 = tpu.matmul %13, %14, %cst_7 {dimension_numbers = #tpu.dot_dimension_numbers<[1], [0], [0], [1], [0, 0, 1, 1], [], []>} : vector<32x256xf32>, vector<256x256xf32>, vector<32x256xf32> -> vector<32x256xf32>
    %c0_8 = arith.constant 0 : index
    %c0_9 = arith.constant 0 : index
    %16 = vector.load %arg5[%c0_8, %c0_9] : memref<32x256xf32, #tpu.memory_space<vmem>>, vector<32x256xf32>
    tpu.vector_store %arg5[%c0_8, %c0_9], %15 {strides = array<i32>} : memref<32x256xf32, #tpu.memory_space<vmem>>, vector<32x256xf32>,
    return
  }
  func.func @transform_0(%arg0: i32, %arg1: i32) -> (i32, i32) {
    %c0_i32 = arith.constant 0 : i32
    %c0_i32_0 = arith.constant 0 : i32
    return %arg0, %c0_i32 : i32, i32
  }
  func.func @transform_1(%arg0: i32, %arg1: i32) -> (i32, i32) {
    %c0_i32 = arith.constant 0 : i32
    %c0_i32_0 = arith.constant 0 : i32
    %c0_i32_1 = arith.constant 0 : i32
    return %c0_i32, %c0_i32_0 : i32, i32
  }
  func.func @transform_2(%arg0: i32, %arg1: i32) -> (i32, i32) {
    %c0_i32 = arith.constant 0 : i32
    %c0_i32_0 = arith.constant 0 : i32
    return %c0_i32, %arg1 : i32, i32
  }
  func.func @transform_3(%arg0: i32, %arg1: i32) -> (i32, i32) {
    %c0_i32 = arith.constant 0 : i32
    return %arg0, %arg1 : i32, i32
  }
}

</mosaic_0001>

<llo_original>
// kernel: tpu_custom_call.1
$region0: #{tpu_custom_call.1}
  #allocation0 [shape = 'u32[]', space=smem, size = 0x4, offset = 0x4, fixed_abs, tag = 'smem constant byte address 0x4 - core index']
  #allocation1 [shape = 'u32[144,128]{1,0:T(1,128)}', space=vmem, size = 0x12000, scoped, tag = 'internal scratch']
  %s0 = inlined_call_operand.hbm [shape: f32[32,256], index: 0, kind: input, shape index: {}]
  %s1 = inlined_call_operand.vmem [shape: f32[1,256], index: 1, kind: input, shape index: {}]
  %s2 = inlined_call_operand.hbm [shape: f32[256,768], index: 2, kind: input, shape index: {}]
  %s3 = inlined_call_operand.hbm [shape: f32[32,768], index: 3, kind: output, shape index: {}]
  %s4 = sld [smem:[#allocation0]]
  $region53: #{tpu_custom_call.1} parent=0
    _
  %s6 = ssub.s32 1, %s4
  %s7 = scalar_select 0, %s6, %s4
  $region1: #{tpu_custom_call.1} parent=0
    #allocation2 [shape = 'u8[32768]{0}', space=vmem, size = 0x8000, scoped, tag = 'input window, operand 0, single buffered']
    #allocation3 [shape = 's32[2]{0}', space=sflag, size = 0x8, scoped, tag = 'scoped memory for tpu_custom_call.1']
    #allocation4 [shape = 's32[2]{0}', space=sflag, size = 0x8, scoped, tag = 'scoped memory for tpu_custom_call.1']
    #allocation5 [shape = 'u8[524288]{0}', space=vmem, size = 0x80000, scoped, tag = 'input window, operand 2']
    #allocation6 [shape = 's32[2]{0}', space=sflag, size = 0x8, scoped, tag = 'scoped memory for tpu_custom_call.1']
    #allocation7 [shape = 'u8[65536]{0}', space=vmem, size = 0x10000, scoped, tag = 'output window, operand 0']
    %8 = vsyncpa [#allocation3], 0
    %9 = vsyncpa [#allocation6], 0
    %s10 = scalar_lea.sflag [#allocation6], 1
    %11 = vsyncpa %s10, 0
    %12 = vsyncpa [#allocation4], 0
    %s13 = scalar_lea.sflag [#allocation4], 1
    %14 = vsyncpa %s13, 0
    loop: start=0, step=1, limit=5
    $region2: #{tpu_custom_call.1} parent=1 // loop_pre_header
      _
    $region3: #{tpu_custom_call.1} parent=1 // loop_header
      %s16 = sphi 0, %s20
      %p17 = scmp.ge.s32.totalorder %s16, 5
      %s23 = sphi 0, %s35
      %s24 = sphi 0, %s31
      %s25 = sphi 0, %s23
      %s26 = sphi 0, %s24
      %s27 = sphi 0, %s25
      %s28 = sphi 0, %s26
      %s38 = sphi 0, %s40
      %s41 = sphi 0, %s38
      %s42 = sphi 0, %s41
      %s58 = sphi 0, %s42
      %s62 = sphi 0, %s62
      %s64 = sphi 0, %s62
      %s65 = sphi 0, %s64
      %s79 = sphi 0, %s65
      %s85 = sphi 0, %s87
      %s88 = sphi 0, %s85
      %s89 = sphi 0, %s88
      %s105 = sphi 0, %s89
      %s113 = sphi 0, %s115
      %s116 = sphi 0, %s113
      %s117 = sphi 0, %s116
      %s133 = sphi 0, %s117
    $region4: #{tpu_custom_call.1} parent=1 // loop_header_branch
      %19 = sbr.rel (%p17) target = $region8
    $region5: #{tpu_custom_call.1} parent=1 // loop_body
      %s21 = ssub.s32 %s16, 1
      %s22 = ssub.s32 %s16, 2
      %s29 = sadd.s32 1, %s24
      %p30 = scmp.ge.s32.totalorder %s29, 3
      %s31 = scalar_select %p30, 0, %s29
      %s32 = sadd.s32 1, %s23
      %s33 = scalar_select %p30, %s32, %s23
      %p34 = scmp.ge.s32.totalorder %s33, 1
      %s35 = scalar_select %p34, 0, %s33
      %s36 = ssub.s32 %s23, %s35
      %p37 = scmp.eq.s32.totalorder %s36, 0
      %s39 = sadd.s32 %s38, 1
      %s40 = scalar_select %p37, %s38, %s39
      %p43 = pneg %p37
      %p44 = scmp.eq.s32.totalorder %s16, 2
      %p45 = por %p43, %p44
      %p46 = scmp.ne.s32.totalorder %s38, %s41
      %p47 = scmp.eq.s32.totalorder %s16, 0
      %p48 = por %p46, %p47
      %p49 = scmp.ne.s32.totalorder %s38, %s41
      %p50 = scmp.eq.s32.totalorder %s21, 2
      %p51 = por %p49, %p50
      %p52 = scmp.ne.s32.totalorder %s41, %s42
      %p53 = scmp.eq.s32.totalorder %s21, 0
      %p54 = por %p52, %p53
      %p55 = scmp.ne.s32.totalorder %s41, %s42
      %p56 = scmp.eq.s32.totalorder %s22, 2
      %p57 = por %p55, %p56
      %p59 = scmp.ne.s32.totalorder %s42, %s58
      %p60 = scmp.eq.s32.totalorder %s22, 0
      %p61 = por %p59, %p60
      %s63 = sadd.s32 %s62, 1
      %p66 = scmp.eq.s32.totalorder %s16, 2
      %p67 = scmp.ne.s32.totalorder %s62, %s64
      %p68 = scmp.eq.s32.totalorder %s16, 0
      %p69 = por %p67, %p68
      %p70 = scmp.ne.s32.totalorder %s62, %s64
      %p71 = scmp.eq.s32.totalorder %s21, 2
      %p72 = por %p70, %p71
      %p73 = scmp.ne.s32.totalorder %s64, %s65
      %p74 = scmp.eq.s32.totalorder %s21, 0
      %p75 = por %p73, %p74
      %p76 = scmp.ne.s32.totalorder %s64, %s65
      %p77 = scmp.eq.s32.totalorder %s22, 2
      %p78 = por %p76, %p77
      %p80 = scmp.ne.s32.totalorder %s65, %s79
      %p81 = scmp.eq.s32.totalorder %s22, 0
      %p82 = por %p80, %p81
      %s83 = ssub.s32 %s24, %s31
      %p84 = scmp.eq.s32.totalorder %s83, 0
      %s86 = sadd.s32 %s85, 1
      %s87 = scalar_select %p84, %s85, %s86
      %p90 = pneg %p84
      %p91 = scmp.eq.s32.totalorder %s16, 2
      %p92 = por %p90, %p91
      %p93 = scmp.ne.s32.totalorder %s85, %s88
      %p94 = scmp.eq.s32.totalorder %s16, 0
      %p95 = por %p93, %p94
      %p96 = scmp.ne.s32.totalorder %s85, %s88
      %p97 = scmp.eq.s32.totalorder %s21, 2
      %p98 = por %p96, %p97
      %p99 = scmp.ne.s32.totalorder %s88, %s89
      %p100 = scmp.eq.s32.totalorder %s21, 0
      %p101 = por %p99, %p100
      %p102 = scmp.ne.s32.totalorder %s88, %s89
      %p103 = scmp.eq.s32.totalorder %s22, 2
      %p104 = por %p102, %p103
      %p106 = scmp.ne.s32.totalorder %s89, %s105
      %p107 = scmp.eq.s32.totalorder %s22, 0
      %p108 = por %p106, %p107
      %s109 = ssub.s32 %s23, %s35
      %s110 = ssub.s32 %s24, %s31
      %s111 = sor.u32 %s109, %s110
      %p112 = scmp.eq.s32.totalorder %s111, 0
      %s114 = sadd.s32 %s113, 1
      %s115 = scalar_select %p112, %s113, %s114
      %p118 = pneg %p112
      %p119 = scmp.eq.s32.totalorder %s16, 2
      %p120 = por %p118, %p119
      %p121 = scmp.ne.s32.totalorder %s113, %s116
      %p122 = scmp.eq.s32.totalorder %s16, 0
      %p123 = por %p121, %p122
      %p124 = scmp.ne.s32.totalorder %s113, %s116
      %p125 = scmp.eq.s32.totalorder %s21, 2
      %p126 = por %p124, %p125
      %p127 = scmp.ne.s32.totalorder %s116, %s117
      %p128 = scmp.eq.s32.totalorder %s21, 0
      %p129 = por %p127, %p128
      %p130 = scmp.ne.s32.totalorder %s116, %s117
      %p131 = scmp.eq.s32.totalorder %s22, 2
      %p132 = por %p130, %p131
      %p134 = scmp.ne.s32.totalorder %s117, %s133
      %p135 = scmp.eq.s32.totalorder %s22, 0
      %p136 = por %p134, %p135
      %p137 = scmp.le.s32.totalorder 1, %s16
      %p138 = scmp.lt.s32.totalorder %s16, 4
      %p139 = pnand %p137, %p138
      %p140 = pneg %p139
      // Predicated region
      $region9: #{tpu_custom_call.1} parent=5 // pred_check
        _
      $region10: #{tpu_custom_call.1} parent=5 // pred_check_branch
        %142 = sbr.rel (%p139) target = $region12
      $region11: #{tpu_custom_call.1} parent=5 // pred_region
        %s143 = ssub.s32 %s16, 1
        // Predicated region
        $region13: #{tpu_custom_call.1} parent=11 // pred_check
          %p144 = pneg %p54
        $region14: #{tpu_custom_call.1} parent=11 // pred_check_branch
          %146 = sbr.rel (%p144) target = $region16
        $region15: #{tpu_custom_call.1} parent=11 // pred_region
          %s147 = smul.u32 4, %s25
          %s149 = ssub.s32 1024, 1024
          %150 = vsyncadd [#allocation3], %s149
          %s151 = smul.addr %s147, 2
          %s152 = smul.addr %s151, 128
          %s153 = scalar_lea.hbm %s0, %s152
          %s154 = sshll.u32 [#allocation2], 4
          %s155 = int_to_ptr.vmem [resolvable:$true] %s154
          %160 = dma.hbm_to_vmem [thread:$0]  %s153, 1024, %s155, [#allocation3], 256, 256, 16
        $region16: #{tpu_custom_call.1} parent=11 // pred_fallthru
          _
        // Predicated region
        $region17: #{tpu_custom_call.1} parent=11 // pred_check
          %p161 = pneg %p75
        $region18: #{tpu_custom_call.1} parent=11 // pred_check_branch
          %163 = sbr.rel (%p161) target = $region20
        $region19: #{tpu_custom_call.1} parent=11 // pred_region
          _
        $region20: #{tpu_custom_call.1} parent=11 // pred_fallthru
          _
      $region12: #{tpu_custom_call.1} parent=5 // pred_fallthru
        _
      %p164 = scmp.lt.s32.totalorder %s16, 3
      // Predicated region
      $region21: #{tpu_custom_call.1} parent=5 // pred_check
        %p165 = pneg %p164
      $region22: #{tpu_custom_call.1} parent=5 // pred_check_branch
        %167 = sbr.rel (%p165) target = $region24
      $region23: #{tpu_custom_call.1} parent=5 // pred_region
        // Predicated region
        $region25: #{tpu_custom_call.1} parent=23 // pred_check
          %p168 = pneg %p95
        $region26: #{tpu_custom_call.1} parent=23 // pred_check_branch
          %170 = sbr.rel (%p168) target = $region28
        $region27: #{tpu_custom_call.1} parent=23 // pred_region
          %s171 = sand.u32 %s85, 1
          %s172 = scalar_lea.sflag [#allocation6], %s171
          %s173 = sand.u32 %s85, 1
          %s174 = smul.addr %s173, 512
          %s175 = scalar_lea.vmem [#allocation5], %s174
          %s176 = smul.u32 2, %s24
          %s178 = ssub.s32 8192, 8192
          %179 = vsyncadd %s172, %s178
          %s180 = smul.addr %s176, 128
          %s181 = scalar_lea.hbm %s2, %s180
          %s182 = sshll.u32 %s175, 4
          %s183 = int_to_ptr.vmem [resolvable:$true] %s182
          %188 = dma.hbm_to_vmem [thread:$0]  %s181, 8192, %s183, %s172, 768, 256, 16
        $region28: #{tpu_custom_call.1} parent=23 // pred_fallthru
          _
      $region24: #{tpu_custom_call.1} parent=5 // pred_fallthru
        _
      %p189 = scmp.le.s32.totalorder 1, %s16
      %p190 = scmp.lt.s32.totalorder %s16, 4
      %p191 = pnand %p189, %p190
      %p192 = pneg %p191
      // Predicated region
      $region29: #{tpu_custom_call.1} parent=5 // pred_check
        _
      $region30: #{tpu_custom_call.1} parent=5 // pred_check_branch
        %194 = sbr.rel (%p191) target = $region32
      $region31: #{tpu_custom_call.1} parent=5 // pred_region
        %s195 = ssub.s32 %s16, 1
        // Predicated region
        $region33: #{tpu_custom_call.1} parent=31 // pred_check
          %p196 = pneg %p54
        $region34: #{tpu_custom_call.1} parent=31 // pred_check_branch
          %198 = sbr.rel (%p196) target = $region36
        $region35: #{tpu_custom_call.1} parent=31 // pred_region
          %199 = dma.done [#allocation3], 1024
        $region36: #{tpu_custom_call.1} parent=31 // pred_fallthru
          _
        %s200 = sand.u32 %s88, 1
        %s201 = scalar_lea.sflag [#allocation6], %s200
        %s202 = sand.u32 %s88, 1
        %s203 = smul.addr %s202, 512
        %s204 = scalar_lea.vmem [#allocation5], %s203
        // Predicated region
        $region37: #{tpu_custom_call.1} parent=31 // pred_check
          %p205 = pneg %p101
        $region38: #{tpu_custom_call.1} parent=31 // pred_check_branch
          %207 = sbr.rel (%p205) target = $region40
        $region39: #{tpu_custom_call.1} parent=31 // pred_region
          %208 = dma.done %s201, 8192
        $region40: #{tpu_custom_call.1} parent=31 // pred_fallthru
          _
        %p209 = pneg %p54
        %p210 = pneg %p51
        %p211 = pneg %p75
        %p212 = pneg %p72
        %s213 = sand.u32 %s88, 1
        %s214 = scalar_lea.sflag [#allocation6], %s213
        %s215 = sand.u32 %s88, 1
        %s216 = smul.addr %s215, 512
        %s217 = scalar_lea.vmem [#allocation5], %s216
        %p218 = pneg %p101
        %p219 = pneg %p98
        %p220 = pneg %p129
        %p221 = pneg %p126
        %s222 = sand.u32 %s116, 1
        %s223 = scalar_lea.sflag [#allocation4], %s222
        %s224 = sand.u32 %s116, 1
        %s225 = smul.addr %s224, 64
        %s226 = scalar_lea.vmem [#allocation7], %s225
        %s227 = smul.u32 4, %s25
        %s228 = smul.u32 2, %s26
        %s229 = smul.u32 4, %s25
        %s230 = smul.u32 2, %s26
        %v231 = vld [vmem:[#allocation2] sm:$0xff]
        %v232 = vld [vmem:[#allocation2 + $0x8] sm:$0xff]
        %v233 = vld [vmem:[#allocation2 + $0x10] sm:$0xff]
        %v234 = vld [vmem:[#allocation2 + $0x18] sm:$0xff]
        %v235 = vld [vmem:[#allocation2 + $0x20] sm:$0xff]
        %v236 = vld [vmem:[#allocation2 + $0x28] sm:$0xff]
        %v237 = vld [vmem:[#allocation2 + $0x30] sm:$0xff]
        %v238 = vld [vmem:[#allocation2 + $0x38] sm:$0xff]
        %v239 = vmul.f32 %v231, %v231
        %v240 = vmul.f32 %v232, %v232
        %v241 = vmul.f32 %v233, %v233
        %v242 = vmul.f32 %v234, %v234
        %v243 = vmul.f32 %v235, %v235
        %v244 = vmul.f32 %v236, %v236
        %v245 = vmul.f32 %v237, %v237
        %v246 = vmul.f32 %v238, %v238
        %v247 = vadd.f32 %v239, %v240
        %248 = vadd.xlane.f32.xlu0 %v247
        %v249 = vpop.xlane.xlu0 %248
        %v250 = vadd.f32 %v241, %v242
        %251 = vadd.xlane.f32.xlu0 %v250
        %v252 = vpop.xlane.xlu0 %251
        %v253 = vadd.f32 %v243, %v244
        %254 = vadd.xlane.f32.xlu0 %v253
        %v255 = vpop.xlane.xlu0 %254
        %v256 = vadd.f32 %v245, %v246
        %257 = vadd.xlane.f32.xlu0 %v256
        %v258 = vpop.xlane.xlu0 %257
        %v259 = vrcp.pop 256.0
        %v260 = vmul.f32 %v249, %v259
        %v261 = vmul.f32 %v252, %v259
        %v262 = vmul.f32 %v255, %v259
        %v263 = vmul.f32 %v258, %v259
        %v264 = vadd.f32 %v260, 1e-06
        %v265 = vadd.f32 %v261, 1e-06
        %v266 = vadd.f32 %v262, 1e-06
        %v267 = vadd.f32 %v263, 1e-06
        %v268 = vrsqrt.pop %v264
        %v269 = vrsqrt.pop %v265
        %v270 = vrsqrt.pop %v266
        %v271 = vrsqrt.pop %v267
        %v272 = vmul.f32 %v231, %v268
        %v273 = vmul.f32 %v232, %v268
        %v274 = vmul.f32 %v233, %v269
        %v275 = vmul.f32 %v234, %v269
        %v276 = vmul.f32 %v235, %v270
        %v277 = vmul.f32 %v236, %v270
        %v278 = vmul.f32 %v237, %v271
        %v279 = vmul.f32 %v238, %v271
        %v280 = vld [vmem:[%s1] sm:$0x3]
        %v282 = vlaneseq
        %v283 = vshrl.u32 %v282, 7
        %v284 = vsub.s32 0, %v283
        %v285 = vrot.slane %v280, %v284
        %v286 = vlaneseq
        %v287 = vshrl.u32 %v286, 7
        %v288 = vsub.s32 1, %v287
        %v289 = vrot.slane %v280, %v288
        %v292 = vmul.f32 %v272, %v285
        %v293 = vmul.f32 %v273, %v289
        %v294 = vmul.f32 %v274, %v285
        %v295 = vmul.f32 %v275, %v289
        %v296 = vmul.f32 %v276, %v285
        %v297 = vmul.f32 %v277, %v289
        %v298 = vmul.f32 %v278, %v285
        %v299 = vmul.f32 %v279, %v289
        %v300 = vld [vmem:[%s204] sm:$0xff]
        %v301 = vld [vmem:[%s204 + $0x8] sm:$0xff]
        %v302 = vld [vmem:[%s204 + $0x10] sm:$0xff]
        %v303 = vld [vmem:[%s204 + $0x18] sm:$0xff]
        %v304 = vld [vmem:[%s204 + $0x20] sm:$0xff]
        %v305 = vld [vmem:[%s204 + $0x28] sm:$0xff]
        %v306 = vld [vmem:[%s204 + $0x30] sm:$0xff]
        %v307 = vld [vmem:[%s204 + $0x38] sm:$0xff]
        %v308 = vld [vmem:[%s204 + $0x40] sm:$0xff]
        %v309 = vld [vmem:[%s204 + $0x48] sm:$0xff]
        %v310 = vld [vmem:[%s204 + $0x50] sm:$0xff]
        %v311 = vld [vmem:[%s204 + $0x58] sm:$0xff]
        %v312 = vld [vmem:[%s204 + $0x60] sm:$0xff]
        %v313 = vld [vmem:[%s204 + $0x68] sm:$0xff]
        %v314 = vld [vmem:[%s204 + $0x70] sm:$0xff]
        %v315 = vld [vmem:[%s204 + $0x78] sm:$0xff]
        %v316 = vld [vmem:[%s204 + $0x80] sm:$0xff]
        %v317 = vld [vmem:[%s204 + $0x88] sm:$0xff]
        %v318 = vld [vmem:[%s204 + $0x90] sm:$0xff]
        %v319 = vld [vmem:[%s204 + $0x98] sm:$0xff]
        %v320 = vld [vmem:[%s204 + $0xa0] sm:$0xff]
        %v321 = vld [vmem:[%s204 + $0xa8] sm:$0xff]
        %v322 = vld [vmem:[%s204 + $0xb0] sm:$0xff]
        %v323 = vld [vmem:[%s204 + $0xb8] sm:$0xff]
        %v324 = vld [vmem:[%s204 + $0xc0] sm:$0xff]
        %v325 = vld [vmem:[%s204 + $0xc8] sm:$0xff]
        %v326 = vld [vmem:[%s204 + $0xd0] sm:$0xff]
        %v327 = vld [vmem:[%s204 + $0xd8] sm:$0xff]
        %v328 = vld [vmem:[%s204 + $0xe0] sm:$0xff]
        %v329 = vld [vmem:[%s204 + $0xe8] sm:$0xff]
        %v330 = vld [vmem:[%s204 + $0xf0] sm:$0xff]
        %v331 = vld [vmem:[%s204 + $0xf8] sm:$0xff]
        %v332 = vld [vmem:[%s204 + $0x100] sm:$0xff]
        %v333 = vld [vmem:[%s204 + $0x108] sm:$0xff]
        %v334 = vld [vmem:[%s204 + $0x110] sm:$0xff]
        %v335 = vld [vmem:[%s204 + $0x118] sm:$0xff]
        %v336 = vld [vmem:[%s204 + $0x120] sm:$0xff]
        %v337 = vld [vmem:[%s204 + $0x128] sm:$0xff]
        %v338 = vld [vmem:[%s204 + $0x130] sm:$0xff]
        %v339 = vld [vmem:[%s204 + $0x138] sm:$0xff]
        %v340 = vld [vmem:[%s204 + $0x140] sm:$0xff]
        %v341 = vld [vmem:[%s204 + $0x148] sm:$0xff]
        %v342 = vld [vmem:[%s204 + $0x150] sm:$0xff]
        %v343 = vld [vmem:[%s204 + $0x158] sm:$0xff]
        %v344 = vld [vmem:[%s204 + $0x160] sm:$0xff]
        %v345 = vld [vmem:[%s204 + $0x168] sm:$0xff]
        %v346 = vld [vmem:[%s204 + $0x170] sm:$0xff]
        %v347 = vld [vmem:[%s204 + $0x178] sm:$0xff]
        %v348 = vld [vmem:[%s204 + $0x180] sm:$0xff]
        %v349 = vld [vmem:[%s204 + $0x188] sm:$0xff]
        %v350 = vld [vmem:[%s204 + $0x190] sm:$0xff]
        %v351 = vld [vmem:[%s204 + $0x198] sm:$0xff]
        %v352 = vld [vmem:[%s204 + $0x1a0] sm:$0xff]
        %v353 = vld [vmem:[%s204 + $0x1a8] sm:$0xff]
        %v354 = vld [vmem:[%s204 + $0x1b0] sm:$0xff]
        %v355 = vld [vmem:[%s204 + $0x1b8] sm:$0xff]
        %v356 = vld [vmem:[%s204 + $0x1c0] sm:$0xff]
        %v357 = vld [vmem:[%s204 + $0x1c8] sm:$0xff]
        %v358 = vld [vmem:[%s204 + $0x1d0] sm:$0xff]
        %v359 = vld [vmem:[%s204 + $0x1d8] sm:$0xff]
        %v360 = vld [vmem:[%s204 + $0x1e0] sm:$0xff]
        %v361 = vld [vmem:[%s204 + $0x1e8] sm:$0xff]
        %v362 = vld [vmem:[%s204 + $0x1f0] sm:$0xff]
        %v363 = vld [vmem:[%s204 + $0x1f8] sm:$0xff]
        %364 = vmatprep.subr.mxu0 %v301
        %365 = vmatpush1.msra.mxu0 %v300
        %366 = vmatprep.subr.mxu0 %v303
        %367 = vmatpush1.msra.mxu0 %v302
        %368 = vmatprep.subr.mxu0 %v305
        %369 = vmatpush1.msra.mxu0 %v304
        %370 = vmatprep.subr.mxu0 %v307
        %371 = vmatpush1.msra.mxu0 %v306
        %372 = vmatprep.subr.mxu0 %v309
        %373 = vmatpush1.msra.mxu0 %v308
        %374 = vmatprep.subr.mxu0 %v311
        %375 = vmatpush1.msra.mxu0 %v310
        %376 = vmatprep.subr.mxu0 %v313
        %377 = vmatpush1.msra.mxu0 %v312
        %378 = vmatprep.subr.mxu0 %v315
        %379 = vmatpush1.msra.mxu0 %v314
        %380 = vmatprep.subr.mxu0 %v317
        %381 = vmatpush1.msra.mxu0 %v316
        %382 = vmatprep.subr.mxu0 %v319
        %383 = vmatpush1.msra.mxu0 %v318
        %384 = vmatprep.subr.mxu0 %v321
        %385 = vmatpush1.msra.mxu0 %v320
        %386 = vmatprep.subr.mxu0 %v323
        %387 = vmatpush1.msra.mxu0 %v322
        %388 = vmatprep.subr.mxu0 %v325
        %389 = vmatpush1.msra.mxu0 %v324
        %390 = vmatprep.subr.mxu0 %v327
        %391 = vmatpush1.msra.mxu0 %v326
        %392 = vmatprep.subr.mxu0 %v329
        %393 = vmatpush1.msra.mxu0 %v328
        %394 = vmatprep.subr.mxu0 %v331
        %395 = vmatpush1.msra.mxu0 %v330
        %396 = vmatprep.subr.mxu0 %v333
        %397 = vmatpush1.msra.mxu0 %v332
        %398 = vmatprep.subr.mxu0 %v335
        %399 = vmatpush1.msra.mxu0 %v334
        %400 = vmatprep.subr.mxu0 %v337
        %401 = vmatpush1.msra.mxu0 %v336
        %402 = vmatprep.subr.mxu0 %v339
        %403 = vmatpush1.msra.mxu0 %v338
        %404 = vmatprep.subr.mxu0 %v341
        %405 = vmatpush1.msra.mxu0 %v340
        %406 = vmatprep.subr.mxu0 %v343
        %407 = vmatpush1.msra.mxu0 %v342
        %408 = vmatprep.subr.mxu0 %v345
        %409 = vmatpush1.msra.mxu0 %v344
        %410 = vmatprep.subr.mxu0 %v347
        %411 = vmatpush1.msra.mxu0 %v346
        %412 = vmatprep.subr.mxu0 %v349
        %413 = vmatpush1.msra.mxu0 %v348
        %414 = vmatprep.subr.mxu0 %v351
        %415 = vmatpush1.msra.mxu0 %v350
        %416 = vmatprep.subr.mxu0 %v353
        %417 = vmatpush1.msra.mxu0 %v352
        %418 = vmatprep.subr.mxu0 %v355
        %419 = vmatpush1.msra.mxu0 %v354
        %420 = vmatprep.subr.mxu0 %v357
        %421 = vmatpush1.msra.mxu0 %v356
        %422 = vmatprep.subr.mxu0 %v359
        %423 = vmatpush1.msra.mxu0 %v358
        %424 = vmatprep.subr.mxu0 %v361
        %425 = vmatpush1.msra.mxu0 %v360
        %426 = vmatprep.subr.mxu0 %v363
        %427 = vmatpush1.msra.mxu0 %v362
        %428 = vmatprep.mubr.f32.mxu0 %v293
        %429 = vmatmul.mubr.f32.gmra.mrb[0].mxu0 %v292
        %v430 = vpop.f32.mrb[0].mxu0
        %v431 = vadd.f32 0.0, %v430
        %v432 = vpop.f32.mrb[0].mxu0
        %v433 = vadd.f32 0.0, %v432
        %434 = vmatprep.mubr.f32.mxu0 %v295
        %435 = vmatmul.mubr.f32.gmra.mrb[0].mxu0 %v294
        %v436 = vpop.f32.mrb[0].mxu0
        %v437 = vadd.f32 0.0, %v436
        %v438 = vpop.f32.mrb[0].mxu0
        %v439 = vadd.f32 0.0, %v438
        %440 = vmatprep.mubr.f32.mxu0 %v297
        %441 = vmatmul.mubr.f32.gmra.mrb[0].mxu0 %v296
        %v442 = vpop.f32.mrb[0].mxu0
        %v443 = vadd.f32 0.0, %v442
        %v444 = vpop.f32.mrb[0].mxu0
        %v445 = vadd.f32 0.0, %v444
        %446 = vmatprep.mubr.f32.mxu0 %v299
        %447 = vmatmul.mubr.f32.gmra.mrb[0].mxu0 %v298
        %v448 = vpop.f32.mrb[0].mxu0
        %v449 = vadd.f32 0.0, %v448
        %v450 = vpop.f32.mrb[0].mxu0
        %v451 = vadd.f32 0.0, %v450
        %452 = vdwg.mxu0
        %453 = vst [vmem:[%s226] sm:$0xff] %v431
        %454 = vst [vmem:[%s226 + $0x8] sm:$0xff] %v433
        %455 = vst [vmem:[%s226 + $0x10] sm:$0xff] %v437
        %456 = vst [vmem:[%s226 + $0x18] sm:$0xff] %v439
        %457 = vst [vmem:[%s226 + $0x20] sm:$0xff] %v443
        %458 = vst [vmem:[%s226 + $0x28] sm:$0xff] %v445
        %459 = vst [vmem:[%s226 + $0x30] sm:$0xff] %v449
        %460 = vst [vmem:[%s226 + $0x38] sm:$0xff] %v451
        %s461 = sand.u32 %s116, 1
        %s462 = scalar_lea.sflag [#allocation4], %s461
        %s463 = sand.u32 %s116, 1
        %s464 = smul.addr %s463, 64
        %s465 = scalar_lea.vmem [#allocation7], %s464
        // Predicated region
        $region41: #{tpu_custom_call.1} parent=31 // pred_check
          %p466 = pneg %p126
        $region42: #{tpu_custom_call.1} parent=31 // pred_check_branch
          %468 = sbr.rel (%p466) target = $region44
        $region43: #{tpu_custom_call.1} parent=31 // pred_region
          %s469 = smul.u32 4, %s25
          %s470 = smul.u32 2, %s26
          %s472 = ssub.s32 1024, 1024
          %473 = vsyncadd %s462, %s472
          %s474 = smul.addr %s469, 6
          %s475 = sadd.s32 %s470, %s474
          %s476 = smul.addr %s475, 128
          %s477 = scalar_lea.hbm %s3, %s476
          %s478 = sshll.u32 %s465, 4
          %s479 = int_to_ptr.vmem [resolvable:$true] %s478
          %484 = dma.vmem_to_hbm [thread:$0]  %s479, 1024, %s477, %s462, 256, 768, 16
        $region44: #{tpu_custom_call.1} parent=31 // pred_fallthru
          _
      $region32: #{tpu_custom_call.1} parent=5 // pred_fallthru
        _
      %p485 = scmp.le.s32.totalorder 2, %s16
      // Predicated region
      $region45: #{tpu_custom_call.1} parent=5 // pred_check
        %p486 = pneg %p485
      $region46: #{tpu_custom_call.1} parent=5 // pred_check_branch
        %488 = sbr.rel (%p486) target = $region48
      $region47: #{tpu_custom_call.1} parent=5 // pred_region
        %s489 = ssub.s32 %s16, 2
        // Predicated region
        $region49: #{tpu_custom_call.1} parent=47 // pred_check
          %p490 = pneg %p132
        $region50: #{tpu_custom_call.1} parent=47 // pred_check_branch
          %492 = sbr.rel (%p490) target = $region52
        $region51: #{tpu_custom_call.1} parent=47 // pred_region
          %s493 = sand.u32 %s117, 1
          %s494 = scalar_lea.sflag [#allocation4], %s493
          %s495 = sand.u32 %s117, 1
          %s496 = smul.addr %s495, 64
          %s497 = scalar_lea.vmem [#allocation7], %s496
          %498 = dma.done %s494, 1024
        $region52: #{tpu_custom_call.1} parent=47 // pred_fallthru
          _
      $region48: #{tpu_custom_call.1} parent=5 // pred_fallthru
        _
    $region6: #{tpu_custom_call.1} parent=1 // loop_footer
      %s20 = sadd.s32 1, %s16
    $region7: #{tpu_custom_call.1} parent=1 // loop_footer_branch
      %15 = sbr.rel target = $region3
    $region8: #{tpu_custom_call.1} parent=1 // loop_exit
      _
    %499 = vsyncpa [#allocation3], 1
    %s500 = scalar_lea.sflag [#allocation3], 1
    %501 = vsyncpa %s500, 1
    %502 = vsyncpa [#allocation6], 1
    %s503 = scalar_lea.sflag [#allocation6], 1
    %504 = vsyncpa %s503, 1
    %505 = vsyncpa [#allocation4], 1
    %s506 = scalar_lea.sflag [#allocation4], 1
    %507 = vsyncpa %s506, 1

</llo_original>
